<compile_context>
chip_gen: v5e
topology: v5e:2x2
jax: 0.10.0
libtpu: 0.0.40
codegen_flags: <defaults>
</compile_context>

<pallas_src>
import jax
import jax.numpy as jnp
from jax.experimental import pallas as pl
from jax.experimental.pallas import tpu as pltpu

EMB_DIM = 64
IN_DIM = 2 * (2 * EMB_DIM + EMB_DIM)         # 384 = Linear in_features
FEAT = IN_DIM // 3                            # 128 each for src / dest / edge_attr


def _round_up(x, m):
    return (x + m - 1) // m * m


def edge_mlp_kernel(src_ref, dest_ref, ea_ref,
                    w1_ref, b1_ref, w2_ref, b2_ref,
                    o_ref):
    # Layer 1: K-split over the three 128-wide streams — mathematically
    # identical to concat([src, dest, ea], 1) @ W1, without materializing the
    # (tm, 384) concat.  Static slices of w1_ref are zero-cost ref views.
    # Activations arrive as f32 from HBM; cast to bf16 in-register for the MXU,
    # accumulate in f32.
    h = jnp.dot(src_ref[...].astype(jnp.bfloat16), w1_ref[0:FEAT, :],
                preferred_element_type=jnp.float32)
    h += jnp.dot(dest_ref[...].astype(jnp.bfloat16), w1_ref[FEAT:2 * FEAT, :],
                 preferred_element_type=jnp.float32)
    h += jnp.dot(ea_ref[...].astype(jnp.bfloat16), w1_ref[2 * FEAT:3 * FEAT, :],
                 preferred_element_type=jnp.float32)
    h = jnp.maximum(h + b1_ref[...], 0.0)

    # Layer 2: bf16 operands into the MXU, f32 accumulation, ReLU, f32 store.
    y = jnp.dot(h.astype(jnp.bfloat16), w2_ref[...],
                preferred_element_type=jnp.float32)
    o_ref[...] = jnp.maximum(y + b2_ref[...], 0.0).astype(o_ref.dtype)


def edge_model_forward(src, dest, edge_attr, params, u=None, batch=None, *, tm=4096):
    """Pallas EdgeModel forward.  src/dest/edge_attr: (E, 128) f32 -> (E, 64) f32.

    u / batch are accepted for signature parity with the PyTorch module but are
    unused by its forward pass.
    """
    del u, batch
    w1, b1, w2, b2 = params
    E = src.shape[0]

    # Weights/biases are tiny (~25K elems) and grid-resident: bf16 weights for
    # the MXU, f32 biases.  (This cast is NOT an E-sized HBM pass.)
    w1_b = w1.astype(jnp.bfloat16)
    w2_b = w2.astype(jnp.bfloat16)
    b1_f = b1.reshape(1, EMB_DIM).astype(jnp.float32)
    b2_f = b2.reshape(1, EMB_DIM).astype(jnp.float32)

    # Row tile: large for bandwidth (amortizes the ~0.35us per-step overhead),
    # clamped for tiny E, multiple of 16 for sublane alignment.  Ragged E is
    # handled by Pallas last-block clipping — no jnp.pad pass over the inputs.
    tm = max(16, min(_round_up(tm, 16), _round_up(E, 16)))
    grid = pl.cdiv(E, tm)

    full = lambda i: (0, 0)   # weights / biases: same block every step (fetched once)
    row = lambda i: (i, 0)

    out = pl.pallas_call(
        edge_mlp_kernel,
        out_shape=jax.ShapeDtypeStruct((E, EMB_DIM), jnp.float32),
        grid_spec=pltpu.PrefetchScalarGridSpec(
            num_scalar_prefetch=0,
            grid=(grid,),
            in_specs=[
                pl.BlockSpec((tm, FEAT), row),            # src      (f32)
                pl.BlockSpec((tm, FEAT), row),            # dest     (f32)
                pl.BlockSpec((tm, FEAT), row),            # edge_attr(f32)
                pl.BlockSpec((IN_DIM, EMB_DIM), full),    # W1 (384, 64) bf16
                pl.BlockSpec((1, EMB_DIM), full),         # b1 f32
                pl.BlockSpec((EMB_DIM, EMB_DIM), full),   # W2 (64, 64) bf16
                pl.BlockSpec((1, EMB_DIM), full),         # b2 f32
            ],
            out_specs=pl.BlockSpec((tm, EMB_DIM), row),
        ),
        compiler_params=pltpu.CompilerParams(
            dimension_semantics=("parallel",),            # megacore sharding on v7x
            vmem_limit_bytes=32 * 1024 * 1024,            # ~16 MiB footprint @ tm=4096
        ),
    )(src, dest, edge_attr, w1_b, b1_f, w2_b, b2_f)
    # TODO(synk): if a trace shows exposed step-boundary DMA, sweep
    # pipeline_mode=pl.Buffered(3) on the three row-tile input specs.
    return out


def init_params(key):
    """Deterministic Linear init (uniform(-1/sqrt(fan_in), 1/sqrt(fan_in)))."""
    k1, k2, k3, k4 = jax.random.split(key, 4)
    lim1 = 1.0 / jnp.sqrt(jnp.float32(IN_DIM))
    lim2 = 1.0 / jnp.sqrt(jnp.float32(EMB_DIM))
    w1 = jax.random.uniform(k1, (IN_DIM, EMB_DIM), jnp.float32, -lim1, lim1)
    b1 = jax.random.uniform(k2, (1, EMB_DIM), jnp.float32, -lim1, lim1)
    w2 = jax.random.uniform(k3, (EMB_DIM, EMB_DIM), jnp.float32, -lim2, lim2)
    b2 = jax.random.uniform(k4, (1, EMB_DIM), jnp.float32, -lim2, lim2)
    return w1, b1, w2, b2


if __name__ == "__main__":
    key = jax.random.PRNGKey(0)
    kp, ks, kd, ke = jax.random.split(key, 4)

    E = 200   # not a multiple of the tile -> exercises the ragged last-block path
    src = jax.random.normal(ks, (E, FEAT), jnp.float32)
    dest = jax.random.normal(kd, (E, FEAT), jnp.float32)
    edge_attr = jax.random.normal(ke, (E, FEAT), jnp.float32)
    # u / batch are unused by the PyTorch forward; passed as None.

    params = init_params(kp)
    out = jax.block_until_ready(
        edge_model_forward(src, dest, edge_attr, params, None, None))
    assert out.shape == (E, EMB_DIM)

    w1, b1, w2, b2 = params
    hi = jax.lax.Precision.HIGHEST

    # Reference 1: same numerics as the kernel (bf16 operands, f32 accumulate).
    xb = jnp.concatenate([src, dest, edge_attr], axis=1) \
            .astype(jnp.bfloat16).astype(jnp.float32)
    w1f = w1.astype(jnp.bfloat16).astype(jnp.float32)
    w2f = w2.astype(jnp.bfloat16).astype(jnp.float32)
    h_ref = jnp.maximum(jnp.dot(xb, w1f, precision=hi) + b1, 0.0)
    ref_mixed = jnp.maximum(
        jnp.dot(h_ref.astype(jnp.bfloat16).astype(jnp.float32), w2f,
                precision=hi) + b2, 0.0)
    assert jnp.allclose(out, ref_mixed, atol=2e-2, rtol=2e-2), \
        float(jnp.max(jnp.abs(out - ref_mixed)))

    # Reference 2: full-f32 semantics of the original PyTorch module (loose tol
    # because the kernel feeds bf16 operands to the MXU).
    x = jnp.concatenate([src, dest, edge_attr], axis=1)
    ref_f32 = jnp.maximum(
        jnp.dot(jnp.maximum(jnp.dot(x, w1, precision=hi) + b1, 0.0), w2,
                precision=hi) + b2, 0.0)
    assert jnp.allclose(out, ref_f32, atol=2e-1, rtol=2e-1), \
        float(jnp.max(jnp.abs(out - ref_f32)))

    print("KERNEL_OK")
</pallas_src>

<mosaic_0001>
module attributes {stable_mosaic.version = 11 : i64} {
  func.func @edge_mlp_kernel(%arg0: i32, %arg1: memref<208x128xf32, #tpu.memory_space<vmem>>, %arg2: memref<208x128xf32, #tpu.memory_space<vmem>>, %arg3: memref<208x128xf32, #tpu.memory_space<vmem>>, %arg4: memref<384x64xbf16, #tpu.memory_space<vmem>>, %arg5: memref<1x64xf32, #tpu.memory_space<vmem>>, %arg6: memref<64x64xbf16, #tpu.memory_space<vmem>>, %arg7: memref<1x64xf32, #tpu.memory_space<vmem>>, %arg8: memref<208x64xf32, #tpu.memory_space<vmem>>) attributes {dimension_semantics = [#tpu.dimension_semantics<parallel>], iteration_bounds = array<i64: 1>, scalar_prefetch = 0 : i64, scratch_operands = 0 : i64, tpu.core_type = #tpu.core_type<tc>, window_params = [{transform_indices = @transform_0, window_bounds = array<i64: 208, 128>}, {transform_indices = @transform_1, window_bounds = array<i64: 208, 128>}, {transform_indices = @transform_2, window_bounds = array<i64: 208, 128>}, {pipeline_mode = #tpu.pipeline_mode<synchronous>, transform_indices = @transform_3, window_bounds = array<i64: 384, 64>}, {pipeline_mode = #tpu.pipeline_mode<synchronous>, transform_indices = @transform_4, window_bounds = array<i64: 1, 64>}, {pipeline_mode = #tpu.pipeline_mode<synchronous>, transform_indices = @transform_5, window_bounds = array<i64: 64, 64>}, {pipeline_mode = #tpu.pipeline_mode<synchronous>, transform_indices = @transform_6, window_bounds = array<i64: 1, 64>}, {transform_indices = @transform_7, window_bounds = array<i64: 208, 64>}]} {
    %c0 = arith.constant 0 : index
    %c0_0 = arith.constant 0 : index
    %0 = vector.load %arg1[%c0, %c0_0] : memref<208x128xf32, #tpu.memory_space<vmem>>, vector<208x128xf32>
    %1 = arith.truncf %0 : vector<208x128xf32> to vector<208x128xbf16>
    %c0_1 = arith.constant 0 : index
    %c0_2 = arith.constant 0 : index
    %2 = vector.load %arg4[%c0_1, %c0_2] : memref<384x64xbf16, #tpu.memory_space<vmem>>, vector<128x64xbf16>
    %cst = arith.constant dense<0.000000e+00> : vector<208x64xf32>
    %3 = tpu.matmul %1, %2, %cst {dimension_numbers = #tpu.dot_dimension_numbers<[1], [0], [0], [1], [0, 0, 1, 1], [], []>} : vector<208x128xbf16>, vector<128x64xbf16>, vector<208x64xf32> -> vector<208x64xf32>
    %c0_3 = arith.constant 0 : index
    %c0_4 = arith.constant 0 : index
    %4 = vector.load %arg2[%c0_3, %c0_4] : memref<208x128xf32, #tpu.memory_space<vmem>>, vector<208x128xf32>
    %5 = arith.truncf %4 : vector<208x128xf32> to vector<208x128xbf16>
    %c128 = arith.constant 128 : index
    %c0_5 = arith.constant 0 : index
    %6 = vector.load %arg4[%c128, %c0_5] : memref<384x64xbf16, #tpu.memory_space<vmem>>, vector<128x64xbf16>
    %cst_6 = arith.constant dense<0.000000e+00> : vector<208x64xf32>
    %7 = tpu.matmul %5, %6, %cst_6 {dimension_numbers = #tpu.dot_dimension_numbers<[1], [0], [0], [1], [0, 0, 1, 1], [], []>} : vector<208x128xbf16>, vector<128x64xbf16>, vector<208x64xf32> -> vector<208x64xf32>
    %8 = arith.addf %3, %7 : vector<208x64xf32>
    %c0_7 = arith.constant 0 : index
    %c0_8 = arith.constant 0 : index
    %9 = vector.load %arg3[%c0_7, %c0_8] : memref<208x128xf32, #tpu.memory_space<vmem>>, vector<208x128xf32>
    %10 = arith.truncf %9 : vector<208x128xf32> to vector<208x128xbf16>
    %c256 = arith.constant 256 : index
    %c0_9 = arith.constant 0 : index
    %11 = vector.load %arg4[%c256, %c0_9] : memref<384x64xbf16, #tpu.memory_space<vmem>>, vector<128x64xbf16>
    %cst_10 = arith.constant dense<0.000000e+00> : vector<208x64xf32>
    %12 = tpu.matmul %10, %11, %cst_10 {dimension_numbers = #tpu.dot_dimension_numbers<[1], [0], [0], [1], [0, 0, 1, 1], [], []>} : vector<208x128xbf16>, vector<128x64xbf16>, vector<208x64xf32> -> vector<208x64xf32>
    %13 = arith.addf %8, %12 : vector<208x64xf32>
    %c0_11 = arith.constant 0 : index
    %c0_12 = arith.constant 0 : index
    %14 = vector.load %arg5[%c0_11, %c0_12] : memref<1x64xf32, #tpu.memory_space<vmem>>, vector<1x64xf32>
    %15 = vector.broadcast %14 : vector<1x64xf32> to vector<208x64xf32>
    %16 = arith.addf %13, %15 : vector<208x64xf32>
    %cst_13 = arith.constant 0.000000e+00 : f32
    %17 = vector.broadcast %cst_13 : f32 to vector<208x64xf32>
    %18 = arith.maximumf %16, %17 : vector<208x64xf32>
    %19 = arith.truncf %18 : vector<208x64xf32> to vector<208x64xbf16>
    %c0_14 = arith.constant 0 : index
    %c0_15 = arith.constant 0 : index
    %20 = vector.load %arg6[%c0_14, %c0_15] : memref<64x64xbf16, #tpu.memory_space<vmem>>, vector<64x64xbf16>
    %cst_16 = arith.constant dense<0.000000e+00> : vector<208x64xf32>
    %21 = tpu.matmul %19, %20, %cst_16 {dimension_numbers = #tpu.dot_dimension_numbers<[1], [0], [0], [1], [0, 0, 1, 1], [], []>} : vector<208x64xbf16>, vector<64x64xbf16>, vector<208x64xf32> -> vector<208x64xf32>
    %c0_17 = arith.constant 0 : index
    %c0_18 = arith.constant 0 : index
    %22 = vector.load %arg7[%c0_17, %c0_18] : memref<1x64xf32, #tpu.memory_space<vmem>>, vector<1x64xf32>
    %23 = vector.broadcast %22 : vector<1x64xf32> to vector<208x64xf32>
    %24 = arith.addf %21, %23 : vector<208x64xf32>
    %cst_19 = arith.constant 0.000000e+00 : f32
    %25 = vector.broadcast %cst_19 : f32 to vector<208x64xf32>
    %26 = arith.maximumf %24, %25 : vector<208x64xf32>
    %c0_20 = arith.constant 0 : index
    %c0_21 = arith.constant 0 : index
    %27 = vector.load %arg8[%c0_20, %c0_21] : memref<208x64xf32, #tpu.memory_space<vmem>>, vector<208x64xf32>
    tpu.vector_store %arg8[%c0_20, %c0_21], %26 {strides = array<i32>} : memref<208x64xf32, #tpu.memory_space<vmem>>, vector<208x64xf32>,
    return
  }
  func.func @transform_0(%arg0: i32) -> (i32, i32) {
    %c0_i32 = arith.constant 0 : i32
    %c0_i32_0 = arith.constant 0 : i32
    return %arg0, %c0_i32 : i32, i32
  }
  func.func @transform_1(%arg0: i32) -> (i32, i32) {
    %c0_i32 = arith.constant 0 : i32
    %c0_i32_0 = arith.constant 0 : i32
    return %arg0, %c0_i32 : i32, i32
  }
  func.func @transform_2(%arg0: i32) -> (i32, i32) {
    %c0_i32 = arith.constant 0 : i32
    %c0_i32_0 = arith.constant 0 : i32
    return %arg0, %c0_i32 : i32, i32
  }
  func.func @transform_3(%arg0: i32) -> (i32, i32) {
    %c0_i32 = arith.constant 0 : i32
    %c0_i32_0 = arith.constant 0 : i32
    %c0_i32_1 = arith.constant 0 : i32
    return %c0_i32, %c0_i32_0 : i32, i32
  }
  func.func @transform_4(%arg0: i32) -> (i32, i32) {
    %c0_i32 = arith.constant 0 : i32
    %c0_i32_0 = arith.constant 0 : i32
    %c0_i32_1 = arith.constant 0 : i32
    return %c0_i32, %c0_i32_0 : i32, i32
  }
  func.func @transform_5(%arg0: i32) -> (i32, i32) {
    %c0_i32 = arith.constant 0 : i32
    %c0_i32_0 = arith.constant 0 : i32
    %c0_i32_1 = arith.constant 0 : i32
    return %c0_i32, %c0_i32_0 : i32, i32
  }
  func.func @transform_6(%arg0: i32) -> (i32, i32) {
    %c0_i32 = arith.constant 0 : i32
    %c0_i32_0 = arith.constant 0 : i32
    %c0_i32_1 = arith.constant 0 : i32
    return %c0_i32, %c0_i32_0 : i32, i32
  }
  func.func @transform_7(%arg0: i32) -> (i32, i32) {
    %c0_i32 = arith.constant 0 : i32
    %c0_i32_0 = arith.constant 0 : i32
    return %arg0, %c0_i32 : i32, i32
  }
}

</mosaic_0001>

<llo_original>
// kernel: tpu_custom_call.1
$region0: #{tpu_custom_call.1}
  #allocation0 [shape = 'u32[]', space=smem, size = 0x4, offset = 0x4, fixed_abs, tag = 'smem constant byte address 0x4 - core index']
  #allocation1 [shape = 'u32[72,128]{1,0:T(1,128)}', space=vmem, size = 0x9000, scoped, tag = 'internal scratch']
  %s0 = inlined_call_operand.vmem [shape: f32[200,128], index: 0, kind: input, shape index: {}]
  %s1 = inlined_call_operand.hbm [shape: f32[200,128], index: 1, kind: input, shape index: {}]
  %s2 = inlined_call_operand.hbm [shape: f32[200,128], index: 2, kind: input, shape index: {}]
  %s3 = inlined_call_operand.vmem [shape: bf16[384,64], index: 3, kind: input, shape index: {}]
  %s4 = inlined_call_operand.vmem [shape: f32[1,64], index: 4, kind: input, shape index: {}]
  %s5 = inlined_call_operand.vmem [shape: bf16[64,64], index: 5, kind: input, shape index: {}]
  %s6 = inlined_call_operand.vmem [shape: f32[1,64], index: 6, kind: input, shape index: {}]
  %s7 = inlined_call_operand.vmem [shape: f32[200,64], index: 7, kind: output, shape index: {}]
  %s8 = sld [smem:[#allocation0]]
  $region80: #{tpu_custom_call.1} parent=0
    _
  %s10 = ssub.s32 1, %s8
  %s11 = scalar_select 0, %s10, %s8
  $region1: #{tpu_custom_call.1} parent=0
    #allocation2 [shape = 'u8[106496]{0}', space=vmem, size = 0x1a000, scoped, tag = 'input window, operand 1, single buffered']
    #allocation3 [shape = 's32[1]{0}', space=sflag, size = 0x4, scoped, tag = 'scoped memory for tpu_custom_call.1']
    #allocation4 [shape = 'u8[106496]{0}', space=vmem, size = 0x1a000, scoped, tag = 'input window, operand 2, single buffered']
    #allocation5 [shape = 's32[1]{0}', space=sflag, size = 0x4, scoped, tag = 'scoped memory for tpu_custom_call.1']
    #allocation6 [shape = 'u8[106496]{0}', space=vmem, size = 0x1a000, scoped, tag = 'output window, operand 0, single buffered']
    %12 = vsyncpa [#allocation3], 0
    %13 = vsyncpa [#allocation5], 0
    // Predicated region
    $region2: #{tpu_custom_call.1} parent=1 // pred_check
      _
    $region3: #{tpu_custom_call.1} parent=1 // pred_check_branch
      %15 = sbr.rel (0) target = $region5
    $region4: #{tpu_custom_call.1} parent=1 // pred_region
      _
    $region5: #{tpu_custom_call.1} parent=1 // pred_fallthru
      _
    // Predicated region
    $region6: #{tpu_custom_call.1} parent=1 // pred_check
      _
    $region7: #{tpu_custom_call.1} parent=1 // pred_check_branch
      %17 = sbr.rel (0) target = $region9
    $region8: #{tpu_custom_call.1} parent=1 // pred_region
      %19 = vsyncadd [#allocation3], 128
      %s20 = sshll.u32 %s1, 4
      %s21 = int_to_ptr.hbm [resolvable:$true] %s20
      %s22 = sshll.u32 [#allocation2], 4
      %s23 = int_to_ptr.vmem [resolvable:$true] %s22
      %28 = dma.hbm_to_vmem [thread:$0]  %s21, 3200, %s23, [#allocation3], 128, 128, 8
    $region9: #{tpu_custom_call.1} parent=1 // pred_fallthru
      _
    // Predicated region
    $region10: #{tpu_custom_call.1} parent=1 // pred_check
      _
    $region11: #{tpu_custom_call.1} parent=1 // pred_check_branch
      %30 = sbr.rel (0) target = $region13
    $region12: #{tpu_custom_call.1} parent=1 // pred_region
      %32 = vsyncadd [#allocation5], 128
      %s33 = sshll.u32 %s2, 4
      %s34 = int_to_ptr.hbm [resolvable:$true] %s33
      %s35 = sshll.u32 [#allocation4], 4
      %s36 = int_to_ptr.vmem [resolvable:$true] %s35
      %41 = dma.hbm_to_vmem [thread:$0]  %s34, 3200, %s36, [#allocation5], 128, 128, 8
    $region13: #{tpu_custom_call.1} parent=1 // pred_fallthru
      _
    // Predicated region
    $region14: #{tpu_custom_call.1} parent=1 // pred_check
      _
    $region15: #{tpu_custom_call.1} parent=1 // pred_check_branch
      %43 = sbr.rel (0) target = $region17
    $region16: #{tpu_custom_call.1} parent=1 // pred_region
      _
    $region17: #{tpu_custom_call.1} parent=1 // pred_fallthru
      _
    // Predicated region
    $region18: #{tpu_custom_call.1} parent=1 // pred_check
      _
    $region19: #{tpu_custom_call.1} parent=1 // pred_check_branch
      %45 = sbr.rel (0) target = $region21
    $region20: #{tpu_custom_call.1} parent=1 // pred_region
      _
    $region21: #{tpu_custom_call.1} parent=1 // pred_fallthru
      _
    // Predicated region
    $region22: #{tpu_custom_call.1} parent=1 // pred_check
      _
    $region23: #{tpu_custom_call.1} parent=1 // pred_check_branch
      %47 = sbr.rel (0) target = $region25
    $region24: #{tpu_custom_call.1} parent=1 // pred_region
      _
    $region25: #{tpu_custom_call.1} parent=1 // pred_fallthru
      _
    // Predicated region
    $region26: #{tpu_custom_call.1} parent=1 // pred_check
      _
    $region27: #{tpu_custom_call.1} parent=1 // pred_check_branch
      %49 = sbr.rel (0) target = $region29
    $region28: #{tpu_custom_call.1} parent=1 // pred_region
      _
    $region29: #{tpu_custom_call.1} parent=1 // pred_fallthru
      _
    // Predicated region
    $region30: #{tpu_custom_call.1} parent=1 // pred_check
      _
    $region31: #{tpu_custom_call.1} parent=1 // pred_check_branch
      %51 = sbr.rel (0) target = $region33
    $region32: #{tpu_custom_call.1} parent=1 // pred_region
      %53 = dma.done [#allocation3], 3328
    $region33: #{tpu_custom_call.1} parent=1 // pred_fallthru
      _
    // Predicated region
    $region34: #{tpu_custom_call.1} parent=1 // pred_check
      _
    $region35: #{tpu_custom_call.1} parent=1 // pred_check_branch
      %55 = sbr.rel (0) target = $region37
    $region36: #{tpu_custom_call.1} parent=1 // pred_region
      %57 = dma.done [#allocation5], 3328
    $region37: #{tpu_custom_call.1} parent=1 // pred_fallthru
      _
    %v59 = vld [vmem:[%s0] sm:$0xff]
    %v60 = vld [vmem:[%s0 + $0x8] sm:$0xff]
    %v61 = vld [vmem:[%s0 + $0x10] sm:$0xff]
    %v62 = vld [vmem:[%s0 + $0x18] sm:$0xff]
    %v63 = vld [vmem:[%s0 + $0x20] sm:$0xff]
    %v64 = vld [vmem:[%s0 + $0x28] sm:$0xff]
    %v65 = vld [vmem:[%s0 + $0x30] sm:$0xff]
    %v66 = vld [vmem:[%s0 + $0x38] sm:$0xff]
    %v67 = vld [vmem:[%s0 + $0x40] sm:$0xff]
    %v68 = vld [vmem:[%s0 + $0x48] sm:$0xff]
    %v69 = vld [vmem:[%s0 + $0x50] sm:$0xff]
    %v70 = vld [vmem:[%s0 + $0x58] sm:$0xff]
    %v71 = vld [vmem:[%s0 + $0x60] sm:$0xff]
    %v72 = vld [vmem:[%s0 + $0x68] sm:$0xff]
    %v73 = vld [vmem:[%s0 + $0x70] sm:$0xff]
    %v74 = vld [vmem:[%s0 + $0x78] sm:$0xff]
    %v75 = vld [vmem:[%s0 + $0x80] sm:$0xff]
    %v76 = vld [vmem:[%s0 + $0x88] sm:$0xff]
    %v77 = vld [vmem:[%s0 + $0x90] sm:$0xff]
    %v78 = vld [vmem:[%s0 + $0x98] sm:$0xff]
    %v79 = vld [vmem:[%s0 + $0xa0] sm:$0xff]
    %v80 = vld [vmem:[%s0 + $0xa8] sm:$0xff]
    %v81 = vld [vmem:[%s0 + $0xb0] sm:$0xff]
    %v82 = vld [vmem:[%s0 + $0xb8] sm:$0xff]
    %v83 = vld [vmem:[%s0 + $0xc0] sm:$0xff]
    %v84 = vld [vmem:[%s0 + $0xc8] sm:$0xff]
    %v85 = vpack.c.bf16 %v60, %v59
    %v86 = vpack.c.bf16 %v62, %v61
    %v87 = vpack.c.bf16 %v64, %v63
    %v88 = vpack.c.bf16 %v66, %v65
    %v89 = vpack.c.bf16 %v68, %v67
    %v90 = vpack.c.bf16 %v70, %v69
    %v91 = vpack.c.bf16 %v72, %v71
    %v92 = vpack.c.bf16 %v74, %v73
    %v93 = vpack.c.bf16 %v76, %v75
    %v94 = vpack.c.bf16 %v78, %v77
    %v95 = vpack.c.bf16 %v80, %v79
    %v96 = vpack.c.bf16 %v82, %v81
    %v97 = vpack.c.bf16 %v84, %v83
    %v98 = vld [vmem:[%s3] sm:$0xf]
    %v99 = vld [vmem:[%s3 + $0x4] sm:$0xf]
    %v100 = vld [vmem:[%s3 + $0x8] sm:$0xf]
    %v101 = vld [vmem:[%s3 + $0xc] sm:$0xf]
    %v102 = vld [vmem:[%s3 + $0x10] sm:$0xf]
    %v103 = vld [vmem:[%s3 + $0x14] sm:$0xf]
    %v104 = vld [vmem:[%s3 + $0x18] sm:$0xf]
    %v105 = vld [vmem:[%s3 + $0x1c] sm:$0xf]
    %v106 = vld [vmem:[%s3 + $0x20] sm:$0xf]
    %v107 = vld [vmem:[%s3 + $0x24] sm:$0xf]
    %v108 = vld [vmem:[%s3 + $0x28] sm:$0xf]
    %v109 = vld [vmem:[%s3 + $0x2c] sm:$0xf]
    %v110 = vld [vmem:[%s3 + $0x30] sm:$0xf]
    %v111 = vld [vmem:[%s3 + $0x34] sm:$0xf]
    %v112 = vld [vmem:[%s3 + $0x38] sm:$0xf]
    %v113 = vld [vmem:[%s3 + $0x3c] sm:$0xf]
    %v114 = vld [vmem:[#allocation2] sm:$0xff]
    %v115 = vld [vmem:[#allocation2 + $0x8] sm:$0xff]
    %v116 = vld [vmem:[#allocation2 + $0x10] sm:$0xff]
    %v117 = vld [vmem:[#allocation2 + $0x18] sm:$0xff]
    %v118 = vld [vmem:[#allocation2 + $0x20] sm:$0xff]
    %v119 = vld [vmem:[#allocation2 + $0x28] sm:$0xff]
    %v120 = vld [vmem:[#allocation2 + $0x30] sm:$0xff]
    %v121 = vld [vmem:[#allocation2 + $0x38] sm:$0xff]
    %v122 = vld [vmem:[#allocation2 + $0x40] sm:$0xff]
    %v123 = vld [vmem:[#allocation2 + $0x48] sm:$0xff]
    %v124 = vld [vmem:[#allocation2 + $0x50] sm:$0xff]
    %v125 = vld [vmem:[#allocation2 + $0x58] sm:$0xff]
    %v126 = vld [vmem:[#allocation2 + $0x60] sm:$0xff]
    %v127 = vld [vmem:[#allocation2 + $0x68] sm:$0xff]
    %v128 = vld [vmem:[#allocation2 + $0x70] sm:$0xff]
    %v129 = vld [vmem:[#allocation2 + $0x78] sm:$0xff]
    %v130 = vld [vmem:[#allocation2 + $0x80] sm:$0xff]
    %v131 = vld [vmem:[#allocation2 + $0x88] sm:$0xff]
    %v132 = vld [vmem:[#allocation2 + $0x90] sm:$0xff]
    %v133 = vld [vmem:[#allocation2 + $0x98] sm:$0xff]
    %v134 = vld [vmem:[#allocation2 + $0xa0] sm:$0xff]
    %v135 = vld [vmem:[#allocation2 + $0xa8] sm:$0xff]
    %v136 = vld [vmem:[#allocation2 + $0xb0] sm:$0xff]
    %v137 = vld [vmem:[#allocation2 + $0xb8] sm:$0xff]
    %v138 = vld [vmem:[#allocation2 + $0xc0] sm:$0xff]
    %v139 = vld [vmem:[#allocation2 + $0xc8] sm:$0xff]
    %v140 = vpack.c.bf16 %v115, %v114
    %v141 = vpack.c.bf16 %v117, %v116
    %v142 = vpack.c.bf16 %v119, %v118
    %v143 = vpack.c.bf16 %v121, %v120
    %v144 = vpack.c.bf16 %v123, %v122
    %v145 = vpack.c.bf16 %v125, %v124
    %v146 = vpack.c.bf16 %v127, %v126
    %v147 = vpack.c.bf16 %v129, %v128
    %v148 = vpack.c.bf16 %v131, %v130
    %v149 = vpack.c.bf16 %v133, %v132
    %v150 = vpack.c.bf16 %v135, %v134
    %v151 = vpack.c.bf16 %v137, %v136
    %v152 = vpack.c.bf16 %v139, %v138
    %v153 = vld [vmem:[%s3 + $0x40] sm:$0xf]
    %v154 = vld [vmem:[%s3 + $0x44] sm:$0xf]
    %v155 = vld [vmem:[%s3 + $0x48] sm:$0xf]
    %v156 = vld [vmem:[%s3 + $0x4c] sm:$0xf]
    %v157 = vld [vmem:[%s3 + $0x50] sm:$0xf]
    %v158 = vld [vmem:[%s3 + $0x54] sm:$0xf]
    %v159 = vld [vmem:[%s3 + $0x58] sm:$0xf]
    %v160 = vld [vmem:[%s3 + $0x5c] sm:$0xf]
    %v161 = vld [vmem:[%s3 + $0x60] sm:$0xf]
    %v162 = vld [vmem:[%s3 + $0x64] sm:$0xf]
    %v163 = vld [vmem:[%s3 + $0x68] sm:$0xf]
    %v164 = vld [vmem:[%s3 + $0x6c] sm:$0xf]
    %v165 = vld [vmem:[%s3 + $0x70] sm:$0xf]
    %v166 = vld [vmem:[%s3 + $0x74] sm:$0xf]
    %v167 = vld [vmem:[%s3 + $0x78] sm:$0xf]
    %v168 = vld [vmem:[%s3 + $0x7c] sm:$0xf]
    %v185 = vunpack.c.l.b16 %v153
    %v186 = vunpack.c.l.b16 %v154
    %v187 = vunpack.c.l.b16 %v155
    %v188 = vunpack.c.l.b16 %v156
    %v189 = vunpack.c.l.b16 %v157
    %v190 = vunpack.c.l.b16 %v158
    %v191 = vunpack.c.l.b16 %v159
    %v192 = vunpack.c.l.b16 %v160
    %v193 = vunpack.c.l.b16 %v161
    %v194 = vunpack.c.l.b16 %v162
    %v195 = vunpack.c.l.b16 %v163
    %v196 = vunpack.c.l.b16 %v164
    %v197 = vunpack.c.l.b16 %v165
    %v198 = vunpack.c.l.b16 %v166
    %v199 = vunpack.c.l.b16 %v167
    %v200 = vunpack.c.l.b16 %v168
    %v201 = vpack.c.b16 %v186, %v185
    %v202 = vpack.c.b16 %v188, %v187
    %v203 = vpack.c.b16 %v190, %v189
    %v204 = vpack.c.b16 %v192, %v191
    %v205 = vpack.c.b16 %v194, %v193
    %v206 = vpack.c.b16 %v196, %v195
    %v207 = vpack.c.b16 %v198, %v197
    %v208 = vpack.c.b16 %v200, %v199
    %217 = vmatpush.bf16.msra.mxu0 %v208
    %218 = vmatpush.bf16.msra.mxu0 %v207
    %219 = vmatpush.bf16.msra.mxu0 %v206
    %220 = vmatpush.bf16.msra.mxu0 %v205
    %221 = vmatpush.bf16.msra.mxu0 %v204
    %222 = vmatpush.bf16.msra.mxu0 %v203
    %223 = vmatpush.bf16.msra.mxu0 %v202
    %224 = vmatpush.bf16.msra.mxu0 %v201
    %225 = vmatmul.bf16.gmra.mxu0 %v140
    %v226 = vpop.f32.mrf.mxu0
    %v227 = vadd.f32 0.0, %v226
    %v228 = vpop.f32.mrf.mxu0
    %v229 = vadd.f32 0.0, %v228
    %230 = vmatmul.bf16.gmra.mxu0 %v141
    %v231 = vpop.f32.mrf.mxu0
    %v232 = vadd.f32 0.0, %v231
    %v233 = vpop.f32.mrf.mxu0
    %v234 = vadd.f32 0.0, %v233
    %235 = vmatmul.bf16.gmra.mxu0 %v142
    %v236 = vpop.f32.mrf.mxu0
    %v237 = vadd.f32 0.0, %v236
    %v238 = vpop.f32.mrf.mxu0
    %v239 = vadd.f32 0.0, %v238
    %240 = vmatmul.bf16.gmra.mxu0 %v143
    %v241 = vpop.f32.mrf.mxu0
    %v242 = vadd.f32 0.0, %v241
    %v243 = vpop.f32.mrf.mxu0
    %v244 = vadd.f32 0.0, %v243
    %245 = vmatmul.bf16.gmra.mxu0 %v144
    %v246 = vpop.f32.mrf.mxu0
    %v247 = vadd.f32 0.0, %v246
    %v248 = vpop.f32.mrf.mxu0
    %v249 = vadd.f32 0.0, %v248
    %250 = vmatmul.bf16.gmra.mxu0 %v145
    %v251 = vpop.f32.mrf.mxu0
    %v252 = vadd.f32 0.0, %v251
    %v253 = vpop.f32.mrf.mxu0
    %v254 = vadd.f32 0.0, %v253
    %255 = vmatmul.bf16.gmra.mxu0 %v146
    %v256 = vpop.f32.mrf.mxu0
    %v257 = vadd.f32 0.0, %v256
    %v258 = vpop.f32.mrf.mxu0
    %v259 = vadd.f32 0.0, %v258
    %260 = vmatmul.bf16.gmra.mxu0 %v147
    %v261 = vpop.f32.mrf.mxu0
    %v262 = vadd.f32 0.0, %v261
    %v263 = vpop.f32.mrf.mxu0
    %v264 = vadd.f32 0.0, %v263
    %265 = vmatmul.bf16.gmra.mxu0 %v148
    %v266 = vpop.f32.mrf.mxu0
    %v267 = vadd.f32 0.0, %v266
    %v268 = vpop.f32.mrf.mxu0
    %v269 = vadd.f32 0.0, %v268
    %270 = vmatmul.bf16.gmra.mxu0 %v149
    %v271 = vpop.f32.mrf.mxu0
    %v272 = vadd.f32 0.0, %v271
    %v273 = vpop.f32.mrf.mxu0
    %v274 = vadd.f32 0.0, %v273
    %275 = vmatmul.bf16.gmra.mxu0 %v150
    %v276 = vpop.f32.mrf.mxu0
    %v277 = vadd.f32 0.0, %v276
    %v278 = vpop.f32.mrf.mxu0
    %v279 = vadd.f32 0.0, %v278
    %280 = vmatmul.bf16.gmra.mxu0 %v151
    %v281 = vpop.f32.mrf.mxu0
    %v282 = vadd.f32 0.0, %v281
    %v283 = vpop.f32.mrf.mxu0
    %v284 = vadd.f32 0.0, %v283
    %285 = vmatmul.bf16.gmra.mxu0 %v152
    %v286 = vpop.f32.mrf.mxu0
    %v287 = vadd.f32 0.0, %v286
    %v288 = vpop.f32.mrf.mxu0
    %v289 = vadd.f32 0.0, %v288
    %290 = vdwg.mxu0
    %v307 = vunpack.c.l.b16 %v98
    %v308 = vunpack.c.l.b16 %v99
    %v309 = vunpack.c.l.b16 %v100
    %v310 = vunpack.c.l.b16 %v101
    %v311 = vunpack.c.l.b16 %v102
    %v312 = vunpack.c.l.b16 %v103
    %v313 = vunpack.c.l.b16 %v104
    %v314 = vunpack.c.l.b16 %v105
    %v315 = vunpack.c.l.b16 %v106
    %v316 = vunpack.c.l.b16 %v107
    %v317 = vunpack.c.l.b16 %v108
    %v318 = vunpack.c.l.b16 %v109
    %v319 = vunpack.c.l.b16 %v110
    %v320 = vunpack.c.l.b16 %v111
    %v321 = vunpack.c.l.b16 %v112
    %v322 = vunpack.c.l.b16 %v113
    %v323 = vpack.c.b16 %v308, %v307
    %v324 = vpack.c.b16 %v310, %v309
    %v325 = vpack.c.b16 %v312, %v311
    %v326 = vpack.c.b16 %v314, %v313
    %v327 = vpack.c.b16 %v316, %v315
    %v328 = vpack.c.b16 %v318, %v317
    %v329 = vpack.c.b16 %v320, %v319
    %v330 = vpack.c.b16 %v322, %v321
    %339 = vmatpush.bf16.msra.mxu0 %v330
    %340 = vmatpush.bf16.msra.mxu0 %v329
    %341 = vmatpush.bf16.msra.mxu0 %v328
    %342 = vmatpush.bf16.msra.mxu0 %v327
    %343 = vmatpush.bf16.msra.mxu0 %v326
    %344 = vmatpush.bf16.msra.mxu0 %v325
    %345 = vmatpush.bf16.msra.mxu0 %v324
    %346 = vmatpush.bf16.msra.mxu0 %v323
    %347 = vmatmul.bf16.gmra.mxu0 %v85
    %v348 = vpop.f32.mrf.mxu0
    %v349 = vadd.f32 %v227, %v348
    %v350 = vpop.f32.mrf.mxu0
    %v351 = vadd.f32 %v229, %v350
    %352 = vmatmul.bf16.gmra.mxu0 %v86
    %v353 = vpop.f32.mrf.mxu0
    %v354 = vadd.f32 %v232, %v353
    %v355 = vpop.f32.mrf.mxu0
    %v356 = vadd.f32 %v234, %v355
    %357 = vmatmul.bf16.gmra.mxu0 %v87
    %v358 = vpop.f32.mrf.mxu0
    %v359 = vadd.f32 %v237, %v358
    %v360 = vpop.f32.mrf.mxu0
    %v361 = vadd.f32 %v239, %v360
    %362 = vmatmul.bf16.gmra.mxu0 %v88
    %v363 = vpop.f32.mrf.mxu0
    %v364 = vadd.f32 %v242, %v363
    %v365 = vpop.f32.mrf.mxu0
    %v366 = vadd.f32 %v244, %v365
    %367 = vmatmul.bf16.gmra.mxu0 %v89
    %v368 = vpop.f32.mrf.mxu0
    %v369 = vadd.f32 %v247, %v368
    %v370 = vpop.f32.mrf.mxu0
    %v371 = vadd.f32 %v249, %v370
    %372 = vmatmul.bf16.gmra.mxu0 %v90
    %v373 = vpop.f32.mrf.mxu0
    %v374 = vadd.f32 %v252, %v373
    %v375 = vpop.f32.mrf.mxu0
    %v376 = vadd.f32 %v254, %v375
    %377 = vmatmul.bf16.gmra.mxu0 %v91
    %v378 = vpop.f32.mrf.mxu0
    %v379 = vadd.f32 %v257, %v378
    %v380 = vpop.f32.mrf.mxu0
    %v381 = vadd.f32 %v259, %v380
    %382 = vmatmul.bf16.gmra.mxu0 %v92
    %v383 = vpop.f32.mrf.mxu0
    %v384 = vadd.f32 %v262, %v383
    %v385 = vpop.f32.mrf.mxu0
    %v386 = vadd.f32 %v264, %v385
    %387 = vmatmul.bf16.gmra.mxu0 %v93
    %v388 = vpop.f32.mrf.mxu0
    %v389 = vadd.f32 %v267, %v388
    %v390 = vpop.f32.mrf.mxu0
    %v391 = vadd.f32 %v269, %v390
    %392 = vmatmul.bf16.gmra.mxu0 %v94
    %v393 = vpop.f32.mrf.mxu0
    %v394 = vadd.f32 %v272, %v393
    %v395 = vpop.f32.mrf.mxu0
    %v396 = vadd.f32 %v274, %v395
    %397 = vmatmul.bf16.gmra.mxu0 %v95
    %v398 = vpop.f32.mrf.mxu0
    %v399 = vadd.f32 %v277, %v398
    %v400 = vpop.f32.mrf.mxu0
    %v401 = vadd.f32 %v279, %v400
    %402 = vmatmul.bf16.gmra.mxu0 %v96
    %v403 = vpop.f32.mrf.mxu0
    %v404 = vadd.f32 %v282, %v403
    %v405 = vpop.f32.mrf.mxu0
    %v406 = vadd.f32 %v284, %v405
    %407 = vmatmul.bf16.gmra.mxu0 %v97
    %v408 = vpop.f32.mrf.mxu0
    %v409 = vadd.f32 %v287, %v408
    %v410 = vpop.f32.mrf.mxu0
    %v411 = vadd.f32 %v289, %v410
    %412 = vdwg.mxu0
    %v413 = vld [vmem:[#allocation4] sm:$0xff]
    %v414 = vld [vmem:[#allocation4 + $0x8] sm:$0xff]
    %v415 = vld [vmem:[#allocation4 + $0x10] sm:$0xff]
    %v416 = vld [vmem:[#allocation4 + $0x18] sm:$0xff]
    %v417 = vld [vmem:[#allocation4 + $0x20] sm:$0xff]
    %v418 = vld [vmem:[#allocation4 + $0x28] sm:$0xff]
    %v419 = vld [vmem:[#allocation4 + $0x30] sm:$0xff]
    %v420 = vld [vmem:[#allocation4 + $0x38] sm:$0xff]
    %v421 = vld [vmem:[#allocation4 + $0x40] sm:$0xff]
    %v422 = vld [vmem:[#allocation4 + $0x48] sm:$0xff]
    %v423 = vld [vmem:[#allocation4 + $0x50] sm:$0xff]
    %v424 = vld [vmem:[#allocation4 + $0x58] sm:$0xff]
    %v425 = vld [vmem:[#allocation4 + $0x60] sm:$0xff]
    %v426 = vld [vmem:[#allocation4 + $0x68] sm:$0xff]
    %v427 = vld [vmem:[#allocation4 + $0x70] sm:$0xff]
    %v428 = vld [vmem:[#allocation4 + $0x78] sm:$0xff]
    %v429 = vld [vmem:[#allocation4 + $0x80] sm:$0xff]
    %v430 = vld [vmem:[#allocation4 + $0x88] sm:$0xff]
    %v431 = vld [vmem:[#allocation4 + $0x90] sm:$0xff]
    %v432 = vld [vmem:[#allocation4 + $0x98] sm:$0xff]
    %v433 = vld [vmem:[#allocation4 + $0xa0] sm:$0xff]
    %v434 = vld [vmem:[#allocation4 + $0xa8] sm:$0xff]
    %v435 = vld [vmem:[#allocation4 + $0xb0] sm:$0xff]
    %v436 = vld [vmem:[#allocation4 + $0xb8] sm:$0xff]
    %v437 = vld [vmem:[#allocation4 + $0xc0] sm:$0xff]
    %v438 = vld [vmem:[#allocation4 + $0xc8] sm:$0xff]
    %v439 = vpack.c.bf16 %v414, %v413
    %v440 = vpack.c.bf16 %v416, %v415
    %v441 = vpack.c.bf16 %v418, %v417
    %v442 = vpack.c.bf16 %v420, %v419
    %v443 = vpack.c.bf16 %v422, %v421
    %v444 = vpack.c.bf16 %v424, %v423
    %v445 = vpack.c.bf16 %v426, %v425
    %v446 = vpack.c.bf16 %v428, %v427
    %v447 = vpack.c.bf16 %v430, %v429
    %v448 = vpack.c.bf16 %v432, %v431
    %v449 = vpack.c.bf16 %v434, %v433
    %v450 = vpack.c.bf16 %v436, %v435
    %v451 = vpack.c.bf16 %v438, %v437
    %v452 = vld [vmem:[%s3 + $0x80] sm:$0xf]
    %v453 = vld [vmem:[%s3 + $0x84] sm:$0xf]
    %v454 = vld [vmem:[%s3 + $0x88] sm:$0xf]
    %v455 = vld [vmem:[%s3 + $0x8c] sm:$0xf]
    %v456 = vld [vmem:[%s3 + $0x90] sm:$0xf]
    %v457 = vld [vmem:[%s3 + $0x94] sm:$0xf]
    %v458 = vld [vmem:[%s3 + $0x98] sm:$0xf]
    %v459 = vld [vmem:[%s3 + $0x9c] sm:$0xf]
    %v460 = vld [vmem:[%s3 + $0xa0] sm:$0xf]
    %v461 = vld [vmem:[%s3 + $0xa4] sm:$0xf]
    %v462 = vld [vmem:[%s3 + $0xa8] sm:$0xf]
    %v463 = vld [vmem:[%s3 + $0xac] sm:$0xf]
    %v464 = vld [vmem:[%s3 + $0xb0] sm:$0xf]
    %v465 = vld [vmem:[%s3 + $0xb4] sm:$0xf]
    %v466 = vld [vmem:[%s3 + $0xb8] sm:$0xf]
    %v467 = vld [vmem:[%s3 + $0xbc] sm:$0xf]
    %v484 = vunpack.c.l.b16 %v452
    %v485 = vunpack.c.l.b16 %v453
    %v486 = vunpack.c.l.b16 %v454
    %v487 = vunpack.c.l.b16 %v455
    %v488 = vunpack.c.l.b16 %v456
    %v489 = vunpack.c.l.b16 %v457
    %v490 = vunpack.c.l.b16 %v458
    %v491 = vunpack.c.l.b16 %v459
    %v492 = vunpack.c.l.b16 %v460
    %v493 = vunpack.c.l.b16 %v461
    %v494 = vunpack.c.l.b16 %v462
    %v495 = vunpack.c.l.b16 %v463
    %v496 = vunpack.c.l.b16 %v464
    %v497 = vunpack.c.l.b16 %v465
    %v498 = vunpack.c.l.b16 %v466
    %v499 = vunpack.c.l.b16 %v467
    %v500 = vpack.c.b16 %v485, %v484
    %v501 = vpack.c.b16 %v487, %v486
    %v502 = vpack.c.b16 %v489, %v488
    %v503 = vpack.c.b16 %v491, %v490
    %v504 = vpack.c.b16 %v493, %v492
    %v505 = vpack.c.b16 %v495, %v494
    %v506 = vpack.c.b16 %v497, %v496
    %v507 = vpack.c.b16 %v499, %v498
    %516 = vmatpush.bf16.msra.mxu0 %v507
    %517 = vmatpush.bf16.msra.mxu0 %v506
    %518 = vmatpush.bf16.msra.mxu0 %v505
    %519 = vmatpush.bf16.msra.mxu0 %v504
    %520 = vmatpush.bf16.msra.mxu0 %v503
    %521 = vmatpush.bf16.msra.mxu0 %v502
    %522 = vmatpush.bf16.msra.mxu0 %v501
    %523 = vmatpush.bf16.msra.mxu0 %v500
    %524 = vmatmul.bf16.gmra.mxu0 %v439
    %v525 = vpop.f32.mrf.mxu0
    %v526 = vadd.f32 0.0, %v525
    %v527 = vpop.f32.mrf.mxu0
    %v528 = vadd.f32 0.0, %v527
    %529 = vmatmul.bf16.gmra.mxu0 %v440
    %v530 = vpop.f32.mrf.mxu0
    %v531 = vadd.f32 0.0, %v530
    %v532 = vpop.f32.mrf.mxu0
    %v533 = vadd.f32 0.0, %v532
    %534 = vmatmul.bf16.gmra.mxu0 %v441
    %v535 = vpop.f32.mrf.mxu0
    %v536 = vadd.f32 0.0, %v535
    %v537 = vpop.f32.mrf.mxu0
    %v538 = vadd.f32 0.0, %v537
    %539 = vmatmul.bf16.gmra.mxu0 %v442
    %v540 = vpop.f32.mrf.mxu0
    %v541 = vadd.f32 0.0, %v540
    %v542 = vpop.f32.mrf.mxu0
    %v543 = vadd.f32 0.0, %v542
    %544 = vmatmul.bf16.gmra.mxu0 %v443
    %v545 = vpop.f32.mrf.mxu0
    %v546 = vadd.f32 0.0, %v545
    %v547 = vpop.f32.mrf.mxu0
    %v548 = vadd.f32 0.0, %v547
    %549 = vmatmul.bf16.gmra.mxu0 %v444
    %v550 = vpop.f32.mrf.mxu0
    %v551 = vadd.f32 0.0, %v550
    %v552 = vpop.f32.mrf.mxu0
    %v553 = vadd.f32 0.0, %v552
    %554 = vmatmul.bf16.gmra.mxu0 %v445
    %v555 = vpop.f32.mrf.mxu0
    %v556 = vadd.f32 0.0, %v555
    %v557 = vpop.f32.mrf.mxu0
    %v558 = vadd.f32 0.0, %v557
    %559 = vmatmul.bf16.gmra.mxu0 %v446
    %v560 = vpop.f32.mrf.mxu0
    %v561 = vadd.f32 0.0, %v560
    %v562 = vpop.f32.mrf.mxu0
    %v563 = vadd.f32 0.0, %v562
    %564 = vmatmul.bf16.gmra.mxu0 %v447
    %v565 = vpop.f32.mrf.mxu0
    %v566 = vadd.f32 0.0, %v565
    %v567 = vpop.f32.mrf.mxu0
    %v568 = vadd.f32 0.0, %v567
    %569 = vmatmul.bf16.gmra.mxu0 %v448
    %v570 = vpop.f32.mrf.mxu0
    %v571 = vadd.f32 0.0, %v570
    %v572 = vpop.f32.mrf.mxu0
    %v573 = vadd.f32 0.0, %v572
    %574 = vmatmul.bf16.gmra.mxu0 %v449
    %v575 = vpop.f32.mrf.mxu0
    %v576 = vadd.f32 0.0, %v575
    %v577 = vpop.f32.mrf.mxu0
    %v578 = vadd.f32 0.0, %v577
    %579 = vmatmul.bf16.gmra.mxu0 %v450
    %v580 = vpop.f32.mrf.mxu0
    %v581 = vadd.f32 0.0, %v580
    %v582 = vpop.f32.mrf.mxu0
    %v583 = vadd.f32 0.0, %v582
    %584 = vmatmul.bf16.gmra.mxu0 %v451
    %v585 = vpop.f32.mrf.mxu0
    %v586 = vadd.f32 0.0, %v585
    %v587 = vpop.f32.mrf.mxu0
    %v588 = vadd.f32 0.0, %v587
    %589 = vdwg.mxu0
    %v590 = vadd.f32 %v349, %v526
    %v591 = vadd.f32 %v351, %v528
    %v592 = vadd.f32 %v354, %v531
    %v593 = vadd.f32 %v356, %v533
    %v594 = vadd.f32 %v359, %v536
    %v595 = vadd.f32 %v361, %v538
    %v596 = vadd.f32 %v364, %v541
    %v597 = vadd.f32 %v366, %v543
    %v598 = vadd.f32 %v369, %v546
    %v599 = vadd.f32 %v371, %v548
    %v600 = vadd.f32 %v374, %v551
    %v601 = vadd.f32 %v376, %v553
    %v602 = vadd.f32 %v379, %v556
    %v603 = vadd.f32 %v381, %v558
    %v604 = vadd.f32 %v384, %v561
    %v605 = vadd.f32 %v386, %v563
    %v606 = vadd.f32 %v389, %v566
    %v607 = vadd.f32 %v391, %v568
    %v608 = vadd.f32 %v394, %v571
    %v609 = vadd.f32 %v396, %v573
    %v610 = vadd.f32 %v399, %v576
    %v611 = vadd.f32 %v401, %v578
    %v612 = vadd.f32 %v404, %v581
    %v613 = vadd.f32 %v406, %v583
    %v614 = vadd.f32 %v409, %v586
    %v615 = vadd.f32 %v411, %v588
    %v616 = vld [vmem:[%s4] sm:$0x1]
    %v618 = vperm.slane %v616, 0
    %v620 = vadd.f32 %v590, %v618
    %v621 = vadd.f32 %v591, %v618
    %v622 = vadd.f32 %v592, %v618
    %v623 = vadd.f32 %v593, %v618
    %v624 = vadd.f32 %v594, %v618
    %v625 = vadd.f32 %v595, %v618
    %v626 = vadd.f32 %v596, %v618
    %v627 = vadd.f32 %v597, %v618
    %v628 = vadd.f32 %v598, %v618
    %v629 = vadd.f32 %v599, %v618
    %v630 = vadd.f32 %v600, %v618
    %v631 = vadd.f32 %v601, %v618
    %v632 = vadd.f32 %v602, %v618
    %v633 = vadd.f32 %v603, %v618
    %v634 = vadd.f32 %v604, %v618
    %v635 = vadd.f32 %v605, %v618
    %v636 = vadd.f32 %v606, %v618
    %v637 = vadd.f32 %v607, %v618
    %v638 = vadd.f32 %v608, %v618
    %v639 = vadd.f32 %v609, %v618
    %v640 = vadd.f32 %v610, %v618
    %v641 = vadd.f32 %v611, %v618
    %v642 = vadd.f32 %v612, %v618
    %v643 = vadd.f32 %v613, %v618
    %v644 = vadd.f32 %v614, %v618
    %v645 = vadd.f32 %v615, %v618
    %v646 = vmax.f32 %v620, 0.0
    %v647 = vmax.f32 %v621, 0.0
    %v648 = vmax.f32 %v622, 0.0
    %v649 = vmax.f32 %v623, 0.0
    %v650 = vmax.f32 %v624, 0.0
    %v651 = vmax.f32 %v625, 0.0
    %v652 = vmax.f32 %v626, 0.0
    %v653 = vmax.f32 %v627, 0.0
    %v654 = vmax.f32 %v628, 0.0
    %v655 = vmax.f32 %v629, 0.0
    %v656 = vmax.f32 %v630, 0.0
    %v657 = vmax.f32 %v631, 0.0
    %v658 = vmax.f32 %v632, 0.0
    %v659 = vmax.f32 %v633, 0.0
    %v660 = vmax.f32 %v634, 0.0
    %v661 = vmax.f32 %v635, 0.0
    %v662 = vmax.f32 %v636, 0.0
    %v663 = vmax.f32 %v637, 0.0
    %v664 = vmax.f32 %v638, 0.0
    %v665 = vmax.f32 %v639, 0.0
    %v666 = vmax.f32 %v640, 0.0
    %v667 = vmax.f32 %v641, 0.0
    %v668 = vmax.f32 %v642, 0.0
    %v669 = vmax.f32 %v643, 0.0
    %v670 = vmax.f32 %v644, 0.0
    %v671 = vmax.f32 %v645, 0.0
    %v672 = vpack.c.bf16 %v647, %v646
    %v673 = vpack.c.bf16 %v649, %v648
    %v674 = vpack.c.bf16 %v651, %v650
    %v675 = vpack.c.bf16 %v653, %v652
    %v676 = vpack.c.bf16 %v655, %v654
    %v677 = vpack.c.bf16 %v657, %v656
    %v678 = vpack.c.bf16 %v659, %v658
    %v679 = vpack.c.bf16 %v661, %v660
    %v680 = vpack.c.bf16 %v663, %v662
    %v681 = vpack.c.bf16 %v665, %v664
    %v682 = vpack.c.bf16 %v667, %v666
    %v683 = vpack.c.bf16 %v669, %v668
    %v684 = vpack.c.bf16 %v671, %v670
    %v685 = vld [vmem:[%s5] sm:$0xf]
    %v686 = vld [vmem:[%s5 + $0x4] sm:$0xf]
    %v687 = vld [vmem:[%s5 + $0x8] sm:$0xf]
    %v688 = vld [vmem:[%s5 + $0xc] sm:$0xf]
    %v689 = vld [vmem:[%s5 + $0x10] sm:$0xf]
    %v690 = vld [vmem:[%s5 + $0x14] sm:$0xf]
    %v691 = vld [vmem:[%s5 + $0x18] sm:$0xf]
    %v692 = vld [vmem:[%s5 + $0x1c] sm:$0xf]
    %v693 = vld [vmem:[%s6] sm:$0x1]
    %v695 = vperm.slane %v693, 0
    %v705 = vunpack.c.l.b16 %v685
    %v706 = vunpack.c.l.b16 %v686
    %v707 = vunpack.c.l.b16 %v687
    %v708 = vunpack.c.l.b16 %v688
    %v709 = vunpack.c.l.b16 %v689
    %v710 = vunpack.c.l.b16 %v690
    %v711 = vunpack.c.l.b16 %v691
    %v712 = vunpack.c.l.b16 %v692
    %v713 = vpack.c.b16 %v706, %v705
    %v714 = vpack.c.b16 %v708, %v707
    %v715 = vpack.c.b16 %v710, %v709
    %v716 = vpack.c.b16 %v712, %v711
    %vm721 = vcmask 523264
    %v723 = vsel %vm721, %v672, 0
    %v726 = vsel %vm721, %v673, 0
    %v729 = vsel %vm721, %v674, 0
    %v732 = vsel %vm721, %v675, 0
    %v735 = vsel %vm721, %v676, 0
    %v738 = vsel %vm721, %v677, 0
    %v741 = vsel %vm721, %v678, 0
    %v744 = vsel %vm721, %v679, 0
    %v747 = vsel %vm721, %v680, 0
    %v750 = vsel %vm721, %v681, 0
    %v753 = vsel %vm721, %v682, 0
    %v756 = vsel %vm721, %v683, 0
    %v759 = vsel %vm721, %v684, 0
    %761 = vmatpush.bf16.msra.mxu0 0
    %762 = vmatpush.bf16.msra.mxu0 0
    %763 = vmatpush.bf16.msra.mxu0 0
    %764 = vmatpush.bf16.msra.mxu0 0
    %765 = vmatpush.bf16.msra.mxu0 %v716
    %766 = vmatpush.bf16.msra.mxu0 %v715
    %767 = vmatpush.bf16.msra.mxu0 %v714
    %768 = vmatpush.bf16.msra.mxu0 %v713
    %769 = vmatmul.bf16.gmra.mxu0 %v723
    %v770 = vpop.f32.mrf.mxu0
    %v771 = vadd.f32 %v695, %v770
    %v772 = vpop.f32.mrf.mxu0
    %v773 = vadd.f32 %v695, %v772
    %774 = vmatmul.bf16.gmra.mxu0 %v726
    %v775 = vpop.f32.mrf.mxu0
    %v776 = vadd.f32 %v695, %v775
    %v777 = vpop.f32.mrf.mxu0
    %v778 = vadd.f32 %v695, %v777
    %779 = vmatmul.bf16.gmra.mxu0 %v729
    %v780 = vpop.f32.mrf.mxu0
    %v781 = vadd.f32 %v695, %v780
    %v782 = vpop.f32.mrf.mxu0
    %v783 = vadd.f32 %v695, %v782
    %784 = vmatmul.bf16.gmra.mxu0 %v732
    %v785 = vpop.f32.mrf.mxu0
    %v786 = vadd.f32 %v695, %v785
    %v787 = vpop.f32.mrf.mxu0
    %v788 = vadd.f32 %v695, %v787
    %789 = vmatmul.bf16.gmra.mxu0 %v735
    %v790 = vpop.f32.mrf.mxu0
    %v791 = vadd.f32 %v695, %v790
    %v792 = vpop.f32.mrf.mxu0
    %v793 = vadd.f32 %v695, %v792
    %794 = vmatmul.bf16.gmra.mxu0 %v738
    %v795 = vpop.f32.mrf.mxu0
    %v796 = vadd.f32 %v695, %v795
    %v797 = vpop.f32.mrf.mxu0
    %v798 = vadd.f32 %v695, %v797
    %799 = vmatmul.bf16.gmra.mxu0 %v741
    %v800 = vpop.f32.mrf.mxu0
    %v801 = vadd.f32 %v695, %v800
    %v802 = vpop.f32.mrf.mxu0
    %v803 = vadd.f32 %v695, %v802
    %804 = vmatmul.bf16.gmra.mxu0 %v744
    %v805 = vpop.f32.mrf.mxu0
    %v806 = vadd.f32 %v695, %v805
    %v807 = vpop.f32.mrf.mxu0
    %v808 = vadd.f32 %v695, %v807
    %809 = vmatmul.bf16.gmra.mxu0 %v747
    %v810 = vpop.f32.mrf.mxu0
    %v811 = vadd.f32 %v695, %v810
    %v812 = vpop.f32.mrf.mxu0
    %v813 = vadd.f32 %v695, %v812
    %814 = vmatmul.bf16.gmra.mxu0 %v750
    %v815 = vpop.f32.mrf.mxu0
    %v816 = vadd.f32 %v695, %v815
    %v817 = vpop.f32.mrf.mxu0
    %v818 = vadd.f32 %v695, %v817
    %819 = vmatmul.bf16.gmra.mxu0 %v753
    %v820 = vpop.f32.mrf.mxu0
    %v821 = vadd.f32 %v695, %v820
    %v822 = vpop.f32.mrf.mxu0
    %v823 = vadd.f32 %v695, %v822
    %824 = vmatmul.bf16.gmra.mxu0 %v756
    %v825 = vpop.f32.mrf.mxu0
    %v826 = vadd.f32 %v695, %v825
    %v827 = vpop.f32.mrf.mxu0
    %v828 = vadd.f32 %v695, %v827
    %829 = vmatmul.bf16.gmra.mxu0 %v759
    %v830 = vpop.f32.mrf.mxu0
    %v831 = vadd.f32 %v695, %v830
    %v832 = vpop.f32.mrf.mxu0
    %v833 = vadd.f32 %v695, %v832
    %834 = vdwg.mxu0
    %v835 = vmax.f32 %v771, 0.0
    %v836 = vmax.f32 %v773, 0.0
    %v837 = vmax.f32 %v776, 0.0
    %v838 = vmax.f32 %v778, 0.0
    %v839 = vmax.f32 %v781, 0.0
    %v840 = vmax.f32 %v783, 0.0
    %v841 = vmax.f32 %v786, 0.0
    %v842 = vmax.f32 %v788, 0.0
    %v843 = vmax.f32 %v791, 0.0
    %v844 = vmax.f32 %v793, 0.0
    %v845 = vmax.f32 %v796, 0.0
    %v846 = vmax.f32 %v798, 0.0
    %v847 = vmax.f32 %v801, 0.0
    %v848 = vmax.f32 %v803, 0.0
    %v849 = vmax.f32 %v806, 0.0
    %v850 = vmax.f32 %v808, 0.0
    %v851 = vmax.f32 %v811, 0.0
    %v852 = vmax.f32 %v813, 0.0
    %v853 = vmax.f32 %v816, 0.0
    %v854 = vmax.f32 %v818, 0.0
    %v855 = vmax.f32 %v821, 0.0
    %v856 = vmax.f32 %v823, 0.0
    %v857 = vmax.f32 %v826, 0.0
    %v858 = vmax.f32 %v828, 0.0
    %v859 = vmax.f32 %v831, 0.0
    %v860 = vmax.f32 %v833, 0.0
    %861 = vst.msk [vmem:[#allocation6] sm:$0xff] %vm721, %v835
    %862 = vst.msk [vmem:[#allocation6 + $0x8] sm:$0xff] %vm721, %v836
    %863 = vst.msk [vmem:[#allocation6 + $0x10] sm:$0xff] %vm721, %v837
    %864 = vst.msk [vmem:[#allocation6 + $0x18] sm:$0xff] %vm721, %v838
    %865 = vst.msk [vmem:[#allocation6 + $0x20] sm:$0xff] %vm721, %v839
    %866 = vst.msk [vmem:[#allocation6 + $0x28] sm:$0xff] %vm721, %v840
    %867 = vst.msk [vmem:[#allocation6 + $0x30] sm:$0xff] %vm721, %v841
    %868 = vst.msk [vmem:[#allocation6 + $0x38] sm:$0xff] %vm721, %v842
    %869 = vst.msk [vmem:[#allocation6 + $0x40] sm:$0xff] %vm721, %v843
    %870 = vst.msk [vmem:[#allocation6 + $0x48] sm:$0xff] %vm721, %v844
    %871 = vst.msk [vmem:[#allocation6 + $0x50] sm:$0xff] %vm721, %v845
    %872 = vst.msk [vmem:[#allocation6 + $0x58] sm:$0xff] %vm721, %v846
    %873 = vst.msk [vmem:[#allocation6 + $0x60] sm:$0xff] %vm721, %v847
    %874 = vst.msk [vmem:[#allocation6 + $0x68] sm:$0xff] %vm721, %v848
    %875 = vst.msk [vmem:[#allocation6 + $0x70] sm:$0xff] %vm721, %v849
    %876 = vst.msk [vmem:[#allocation6 + $0x78] sm:$0xff] %vm721, %v850
    %877 = vst.msk [vmem:[#allocation6 + $0x80] sm:$0xff] %vm721, %v851
    %878 = vst.msk [vmem:[#allocation6 + $0x88] sm:$0xff] %vm721, %v852
    %879 = vst.msk [vmem:[#allocation6 + $0x90] sm:$0xff] %vm721, %v853
    %880 = vst.msk [vmem:[#allocation6 + $0x98] sm:$0xff] %vm721, %v854
    %881 = vst.msk [vmem:[#allocation6 + $0xa0] sm:$0xff] %vm721, %v855
    %882 = vst.msk [vmem:[#allocation6 + $0xa8] sm:$0xff] %vm721, %v856
    %883 = vst.msk [vmem:[#allocation6 + $0xb0] sm:$0xff] %vm721, %v857
    %884 = vst.msk [vmem:[#allocation6 + $0xb8] sm:$0xff] %vm721, %v858
    %885 = vst.msk [vmem:[#allocation6 + $0xc0] sm:$0xff] %vm721, %v859
    %886 = vst.msk [vmem:[#allocation6 + $0xc8] sm:$0xff] %vm721, %v860
    // Predicated region
    $region38: #{tpu_custom_call.1} parent=1 // pred_check
      _
    $region39: #{tpu_custom_call.1} parent=1 // pred_check_branch
      %888 = sbr.rel (0) target = $region41
    $region40: #{tpu_custom_call.1} parent=1 // pred_region
      // Predicated region
      $region42: #{tpu_custom_call.1} parent=40 // pred_check
        _
      $region43: #{tpu_custom_call.1} parent=40 // pred_check_branch
        %890 = sbr.rel (0) target = $region45
      $region44: #{tpu_custom_call.1} parent=40 // pred_region
        // Predicated region
        $region46: #{tpu_custom_call.1} parent=44 // pred_check
          _
        $region47: #{tpu_custom_call.1} parent=44 // pred_check_branch
          %892 = sbr.rel (0) target = $region49
        $region48: #{tpu_custom_call.1} parent=44 // pred_region
          // Predicated region
          $region61: #{tpu_custom_call.1} parent=48 // pred_check
            _
          $region62: #{tpu_custom_call.1} parent=48 // pred_check_branch
            %956 = sbr.rel (0) target = $region64
          $region63: #{tpu_custom_call.1} parent=48 // pred_region
            loop: start=0, step=1, limit=1
            $region65: #{tpu_custom_call.1} parent=63 // loop_pre_header
              _
            $region66: #{tpu_custom_call.1} parent=63 // loop_header
              %s958 = sphi 0, %s962
              %p959 = scmp.ge.s32.totalorder %s958, 1
              %s963 = sphi [#allocation6], [#allocation6]
              %s964 = sphi %s7, %s7
            $region67: #{tpu_custom_call.1} parent=63 // loop_header_branch
              %961 = sbr.rel (%p959) target = $region71
            $region68: #{tpu_custom_call.1} parent=63 // loop_body
              %v965 = vld [vmem:[%s963] sm:$0xff]
              %966 = vst [vmem:[%s964] sm:$0xff] %v965
              %v967 = vld [vmem:[%s963 + $0x8] sm:$0xff]
              %968 = vst [vmem:[%s964 + $0x8] sm:$0xff] %v967
              %v969 = vld [vmem:[%s963 + $0x10] sm:$0xff]
              %970 = vst [vmem:[%s964 + $0x10] sm:$0xff] %v969
              %v971 = vld [vmem:[%s963 + $0x18] sm:$0xff]
              %972 = vst [vmem:[%s964 + $0x18] sm:$0xff] %v971
              %v973 = vld [vmem:[%s963 + $0x20] sm:$0xff]
              %974 = vst [vmem:[%s964 + $0x20] sm:$0xff] %v973
              %v975 = vld [vmem:[%s963 + $0x28] sm:$0xff]
              %976 = vst [vmem:[%s964 + $0x28] sm:$0xff] %v975
              %v977 = vld [vmem:[%s963 + $0x30] sm:$0xff]
              %978 = vst [vmem:[%s964 + $0x30] sm:$0xff] %v977
              %v979 = vld [vmem:[%s963 + $0x38] sm:$0xff]
              %980 = vst [vmem:[%s964 + $0x38] sm:$0xff] %v979
              %v981 = vld [vmem:[%s963 + $0x40] sm:$0xff]
              %982 = vst [vmem:[%s964 + $0x40] sm:$0xff] %v981
              %v983 = vld [vmem:[%s963 + $0x48] sm:$0xff]
              %984 = vst [vmem:[%s964 + $0x48] sm:$0xff] %v983
              %v985 = vld [vmem:[%s963 + $0x50] sm:$0xff]
              %986 = vst [vmem:[%s964 + $0x50] sm:$0xff] %v985
              %v987 = vld [vmem:[%s963 + $0x58] sm:$0xff]
              %988 = vst [vmem:[%s964 + $0x58] sm:$0xff] %v987
              %v989 = vld [vmem:[%s963 + $0x60] sm:$0xff]
              %990 = vst [vmem:[%s964 + $0x60] sm:$0xff] %v989
              %v991 = vld [vmem:[%s963 + $0x68] sm:$0xff]
              %992 = vst [vmem:[%s964 + $0x68] sm:$0xff] %v991
              %v993 = vld [vmem:[%s963 + $0x70] sm:$0xff]
              %994 = vst [vmem:[%s964 + $0x70] sm:$0xff] %v993
              %v995 = vld [vmem:[%s963 + $0x78] sm:$0xff]
              %996 = vst [vmem:[%s964 + $0x78] sm:$0xff] %v995
              %v997 = vld [vmem:[%s963 + $0x80] sm:$0xff]
              %998 = vst [vmem:[%s964 + $0x80] sm:$0xff] %v997
              %v999 = vld [vmem:[%s963 + $0x88] sm:$0xff]
              %1000 = vst [vmem:[%s964 + $0x88] sm:$0xff] %v999
              %v1001 = vld [vmem:[%s963 + $0x90] sm:$0xff]
              %1002 = vst [vmem:[%s964 + $0x90] sm:$0xff] %v1001
              %v1003 = vld [vmem:[%s963 + $0x98] sm:$0xff]
              %1004 = vst [vmem:[%s964 + $0x98] sm:$0xff] %v1003
              %v1005 = vld [vmem:[%s963 + $0xa0] sm:$0xff]
              %1006 = vst [vmem:[%s964 + $0xa0] sm:$0xff] %v1005
              %v1007 = vld [vmem:[%s963 + $0xa8] sm:$0xff]
              %1008 = vst [vmem:[%s964 + $0xa8] sm:$0xff] %v1007
              %v1009 = vld [vmem:[%s963 + $0xb0] sm:$0xff]
              %1010 = vst [vmem:[%s964 + $0xb0] sm:$0xff] %v1009
              %v1011 = vld [vmem:[%s963 + $0xb8] sm:$0xff]
              %1012 = vst [vmem:[%s964 + $0xb8] sm:$0xff] %v1011
              %v1013 = vld [vmem:[%s963 + $0xc0] sm:$0xff]
              %1014 = vst [vmem:[%s964 + $0xc0] sm:$0xff] %v1013
            $region69: #{tpu_custom_call.1} parent=63 // loop_footer
              %s962 = sadd.s32 1, %s958
            $region70: #{tpu_custom_call.1} parent=63 // loop_footer_branch
              %957 = sbr.rel target = $region66
            $region71: #{tpu_custom_call.1} parent=63 // loop_exit
              _
          $region64: #{tpu_custom_call.1} parent=48 // pred_fallthru
            _
          // Predicated region
          $region72: #{tpu_custom_call.1} parent=48 // pred_check
            _
          $region73: #{tpu_custom_call.1} parent=48 // pred_check_branch
            %1016 = sbr.rel target = $region75
          $region74: #{tpu_custom_call.1} parent=48 // pred_region
            _
          $region75: #{tpu_custom_call.1} parent=48 // pred_fallthru
            _
        $region49: #{tpu_custom_call.1} parent=44 // pred_fallthru
          _
        // Predicated region
        $region50: #{tpu_custom_call.1} parent=44 // pred_check
          _
        $region51: #{tpu_custom_call.1} parent=44 // pred_check_branch
          %894 = sbr.rel target = $region53
        $region52: #{tpu_custom_call.1} parent=44 // pred_region
          %s896 = ssub.s32 256, 1
          loop: start=0, step=1, limit=1
          $region54: #{tpu_custom_call.1} parent=52 // loop_pre_header
            _
          $region55: #{tpu_custom_call.1} parent=52 // loop_header
            %s898 = sphi 0, %s902
            %p899 = scmp.ge.s32.totalorder %s898, 1
            %s903 = sphi [#allocation6], [#allocation6]
            %s904 = sphi %s7, %s7
          $region56: #{tpu_custom_call.1} parent=52 // loop_header_branch
            %901 = sbr.rel (%p899) target = $region60
          $region57: #{tpu_custom_call.1} parent=52 // loop_body
            %v905 = vld [vmem:[%s903] sm:%s896]
            %906 = vst [vmem:[%s904] sm:%s896] %v905
            %v907 = vld [vmem:[%s903 + $0x8] sm:%s896]
            %908 = vst [vmem:[%s904 + $0x8] sm:%s896] %v907
            %v909 = vld [vmem:[%s903 + $0x10] sm:%s896]
            %910 = vst [vmem:[%s904 + $0x10] sm:%s896] %v909
            %v911 = vld [vmem:[%s903 + $0x18] sm:%s896]
            %912 = vst [vmem:[%s904 + $0x18] sm:%s896] %v911
            %v913 = vld [vmem:[%s903 + $0x20] sm:%s896]
            %914 = vst [vmem:[%s904 + $0x20] sm:%s896] %v913
            %v915 = vld [vmem:[%s903 + $0x28] sm:%s896]
            %916 = vst [vmem:[%s904 + $0x28] sm:%s896] %v915
            %v917 = vld [vmem:[%s903 + $0x30] sm:%s896]
            %918 = vst [vmem:[%s904 + $0x30] sm:%s896] %v917
            %v919 = vld [vmem:[%s903 + $0x38] sm:%s896]
            %920 = vst [vmem:[%s904 + $0x38] sm:%s896] %v919
            %v921 = vld [vmem:[%s903 + $0x40] sm:%s896]
            %922 = vst [vmem:[%s904 + $0x40] sm:%s896] %v921
            %v923 = vld [vmem:[%s903 + $0x48] sm:%s896]
            %924 = vst [vmem:[%s904 + $0x48] sm:%s896] %v923
            %v925 = vld [vmem:[%s903 + $0x50] sm:%s896]
            %926 = vst [vmem:[%s904 + $0x50] sm:%s896] %v925
            %v927 = vld [vmem:[%s903 + $0x58] sm:%s896]
            %928 = vst [vmem:[%s904 + $0x58] sm:%s896] %v927
            %v929 = vld [vmem:[%s903 + $0x60] sm:%s896]
            %930 = vst [vmem:[%s904 + $0x60] sm:%s896] %v929
            %v931 = vld [vmem:[%s903 + $0x68] sm:%s896]
            %932 = vst [vmem:[%s904 + $0x68] sm:%s896] %v931
            %v933 = vld [vmem:[%s903 + $0x70] sm:%s896]
            %934 = vst [vmem:[%s904 + $0x70] sm:%s896] %v933
            %v935 = vld [vmem:[%s903 + $0x78] sm:%s896]
            %936 = vst [vmem:[%s904 + $0x78] sm:%s896] %v935
            %v937 = vld [vmem:[%s903 + $0x80] sm:%s896]
            %938 = vst [vmem:[%s904 + $0x80] sm:%s896] %v937
            %v939 = vld [vmem:[%s903 + $0x88] sm:%s896]
            %940 = vst [vmem:[%s904 + $0x88] sm:%s896] %v939
            %v941 = vld [vmem:[%s903 + $0x90] sm:%s896]
            %942 = vst [vmem:[%s904 + $0x90] sm:%s896] %v941
            %v943 = vld [vmem:[%s903 + $0x98] sm:%s896]
            %944 = vst [vmem:[%s904 + $0x98] sm:%s896] %v943
            %v945 = vld [vmem:[%s903 + $0xa0] sm:%s896]
            %946 = vst [vmem:[%s904 + $0xa0] sm:%s896] %v945
            %v947 = vld [vmem:[%s903 + $0xa8] sm:%s896]
            %948 = vst [vmem:[%s904 + $0xa8] sm:%s896] %v947
            %v949 = vld [vmem:[%s903 + $0xb0] sm:%s896]
            %950 = vst [vmem:[%s904 + $0xb0] sm:%s896] %v949
            %v951 = vld [vmem:[%s903 + $0xb8] sm:%s896]
            %952 = vst [vmem:[%s904 + $0xb8] sm:%s896] %v951
            %v953 = vld [vmem:[%s903 + $0xc0] sm:%s896]
            %954 = vst [vmem:[%s904 + $0xc0] sm:%s896] %v953
          $region58: #{tpu_custom_call.1} parent=52 // loop_footer
            %s902 = sadd.s32 1, %s898
          $region59: #{tpu_custom_call.1} parent=52 // loop_footer_branch
            %897 = sbr.rel target = $region55
          $region60: #{tpu_custom_call.1} parent=52 // loop_exit
            _
        $region53: #{tpu_custom_call.1} parent=44 // pred_fallthru
          _
      $region45: #{tpu_custom_call.1} parent=40 // pred_fallthru
        _
      %1017 = vnop
    $region41: #{tpu_custom_call.1} parent=1 // pred_fallthru
      _
    // Predicated region
    $region76: #{tpu_custom_call.1} parent=1 // pred_check
      _
    $region77: #{tpu_custom_call.1} parent=1 // pred_check_branch
      %1019 = sbr.rel (0) target = $region79
    $region78: #{tpu_custom_call.1} parent=1 // pred_region
      _
    $region79: #{tpu_custom_call.1} parent=1 // pred_fallthru
      _
    %1020 = vsyncpa [#allocation3], 1
    %1021 = vsyncpa [#allocation5], 1

</llo_original>
